<compile_context>
chip_gen: v7x
topology: tpu7x:2x2x1
jax: 0.10.0
libtpu: 0.0.40
codegen_flags: <defaults>
</compile_context>

<pallas_src>
import jax
import jax.numpy as jnp
from jax import lax
from jax.experimental import pallas as pl
from jax.experimental.pallas import tpu as pltpu

EPS = 1e-5  # InstanceNorm1d default eps


def res_conv1d_kernel(x_ref, xres_ref, w_ref, b_ref, out_ref):
    # x_ref:    (1, C, L)   full-channel input (native dtype), NCL layout
    # xres_ref: (1, CT, L)  channel tile of the same input (residual path)
    # w_ref:    (3, CT, C)  conv taps, w_ref[k] = W[:, :, k] as (C_out_tile, C_in)
    # b_ref:    (CT, 1)     conv bias tile
    # out_ref:  (1, CT, L)
    x = x_ref[0]                      # (C, L), native dtype
    C, L = x.shape

    # Shifted views of the input along L via XLU rotate + boundary masking
    # (implements the zero padding of Conv1d(padding=1) without materializing
    # a padded buffer or misaligned slices).
    lane = lax.broadcasted_iota(jnp.int32, (C, L), 1)
    x_prev = jnp.where(lane > 0, pltpu.roll(x, shift=1, axis=1),
                       jnp.zeros_like(x))            # x[:, l-1], 0 at l=0
    x_next = jnp.where(lane < L - 1, pltpu.roll(x, shift=L - 1, axis=1),
                       jnp.zeros_like(x))            # x[:, l+1], 0 at l=L-1

    # Conv1d(k=3) as three MXU matmuls (C_out_tile, C_in) @ (C_in, L),
    # f32 accumulation, bias folded into the accumulator init.
    b = b_ref[...].astype(jnp.float32)               # (CT, 1)
    acc = jnp.dot(w_ref[1], x, preferred_element_type=jnp.float32) + b
    acc = acc + jnp.dot(w_ref[0], x_prev, preferred_element_type=jnp.float32)
    acc = acc + jnp.dot(w_ref[2], x_next, preferred_element_type=jnp.float32)

    # InstanceNorm1d over L (biased variance), single pass: sum & sum-of-squares.
    inv_L = 1.0 / L
    mean = jnp.sum(acc, axis=1, keepdims=True) * inv_L              # (CT, 1)
    ex2 = jnp.sum(acc * acc, axis=1, keepdims=True) * inv_L         # (CT, 1)
    var = jnp.maximum(ex2 - mean * mean, 0.0)
    normed = (acc - mean) * lax.rsqrt(var + EPS)

    # Residual add + ReLU.
    res = xres_ref[0].astype(jnp.float32)                           # (CT, L)
    out = jnp.maximum(normed + res, 0.0)
    out_ref[...] = out[None].astype(out_ref.dtype)


def _choose_cout_tile(C):
    if C % 256 == 0:
        return 256
    if C % 128 == 0:
        return 128
    return C  # full extent (small-C case)


def res_conv1d_block(x, weight, bias):
    """x: (N, C, L), weight: (C_out, C_in, 3), bias: (C_out,)  -> (N, C, L)."""
    N, C, L = x.shape
    CT = _choose_cout_tile(C)

    # (C_out, C_in, 3) -> (3, C_out, C_in); tiny one-time parameter reshuffle.
    wk = jnp.transpose(weight, (2, 0, 1))
    b2d = bias.reshape(C, 1)

    grid = (N, C // CT)
    out = pl.pallas_call(
        res_conv1d_kernel,
        out_shape=jax.ShapeDtypeStruct((N, C, L), x.dtype),
        grid=grid,
        in_specs=[
            pl.BlockSpec((1, C, L), lambda n, j: (n, 0, 0)),    # conv input (all C)
            pl.BlockSpec((1, CT, L), lambda n, j: (n, j, 0)),   # residual tile
            pl.BlockSpec((3, CT, C), lambda n, j: (0, j, 0)),   # weight taps
            pl.BlockSpec((CT, 1), lambda n, j: (j, 0)),         # bias tile
        ],
        out_specs=pl.BlockSpec((1, CT, L), lambda n, j: (n, j, 0)),
        compiler_params=pltpu.CompilerParams(
            dimension_semantics=("parallel", "parallel"),
            vmem_limit_bytes=48 * 1024 * 1024,
        ),
    )(x, x, wk, b2d)
    return out


def _reference(x, weight, bias):
    # Pure-JAX reference matching PyTorch semantics.
    out = lax.conv_general_dilated(
        x, weight, window_strides=(1,), padding=((1, 1),),
        dimension_numbers=("NCH", "OIH", "NCH"),
    ) + bias[None, :, None]
    mean = jnp.mean(out, axis=2, keepdims=True)
    var = jnp.mean((out - mean) ** 2, axis=2, keepdims=True)
    out = (out - mean) / jnp.sqrt(var + EPS)
    return jnp.maximum(out + x, 0.0)


if __name__ == "__main__":
    N, C, L = 2, 4, 16
    key = jax.random.PRNGKey(0)
    kx, kw, kb = jax.random.split(key, 3)

    x = jax.random.normal(kx, (N, C, L), dtype=jnp.float32)
    # Deterministic parameter init (PyTorch-like uniform bound for Conv1d).
    bound = 1.0 / jnp.sqrt(jnp.float32(C * 3))
    weight = jax.random.uniform(kw, (C, C, 3), jnp.float32, -bound, bound)
    bias = jax.random.uniform(kb, (C,), jnp.float32, -bound, bound)

    y = res_conv1d_block(x, weight, bias)
    y = jax.block_until_ready(y)

    y_ref = _reference(x, weight, bias)
    assert y.shape == (N, C, L)
    assert jnp.allclose(y, y_ref, atol=1e-4, rtol=1e-4), "mismatch vs reference"

    print("KERNEL_OK")
</pallas_src>

<mosaic_0001>
module attributes {stable_mosaic.version = 11 : i64} {
  func.func @res_conv1d_kernel(%arg0: i32, %arg1: i32, %arg2: memref<1x4x16xf32, #tpu.memory_space<vmem>>, %arg3: memref<1x4x16xf32, #tpu.memory_space<vmem>>, %arg4: memref<3x4x4xf32, #tpu.memory_space<vmem>>, %arg5: memref<4x1xf32, #tpu.memory_space<vmem>>, %arg6: memref<1x4x16xf32, #tpu.memory_space<vmem>>) attributes {dimension_semantics = [#tpu.dimension_semantics<parallel>, #tpu.dimension_semantics<parallel>], iteration_bounds = array<i64: 2, 1>, scalar_prefetch = 0 : i64, scratch_operands = 0 : i64, tpu.core_type = #tpu.core_type<tc>, window_params = [{transform_indices = @transform_0, window_bounds = array<i64: 1, 4, 16>}, {transform_indices = @transform_1, window_bounds = array<i64: 1, 4, 16>}, {transform_indices = @transform_2, window_bounds = array<i64: 3, 4, 4>}, {transform_indices = @transform_3, window_bounds = array<i64: 4, 1>}, {transform_indices = @transform_4, window_bounds = array<i64: 1, 4, 16>}]} {
    %c0 = arith.constant 0 : index
    %c0_0 = arith.constant 0 : index
    %c0_1 = arith.constant 0 : index
    %0 = vector.load %arg2[%c0, %c0_0, %c0_1] : memref<1x4x16xf32, #tpu.memory_space<vmem>>, vector<1x4x16xf32>
    %1 = vector.shape_cast %0 : vector<1x4x16xf32> to vector<4x16xf32>
    %2 = tpu.iota {dimensions = array<i32: 1>} : vector<4x16xi32>
    %c0_i32 = arith.constant 0 : i32
    %3 = vector.broadcast %c0_i32 : i32 to vector<4x16xi32>
    %4 = arith.cmpi sgt, %2, %3 : vector<4x16xi32>
    %c1_i32 = arith.constant 1 : i32
    %5 = tpu.dynamic_rotate %1 by %c1_i32 dim 1 : vector<4x16xf32>, i32 -> vector<4x16xf32>
    %cst = arith.constant 0.000000e+00 : f32
    %6 = vector.broadcast %cst : f32 to vector<4x16xf32>
    %7 = arith.select %4, %5, %6 : vector<4x16xi1>, vector<4x16xf32>
    %c15_i32 = arith.constant 15 : i32
    %8 = vector.broadcast %c15_i32 : i32 to vector<4x16xi32>
    %9 = arith.cmpi slt, %2, %8 : vector<4x16xi32>
    %c15_i32_2 = arith.constant 15 : i32
    %10 = tpu.dynamic_rotate %1 by %c15_i32_2 dim 1 : vector<4x16xf32>, i32 -> vector<4x16xf32>
    %cst_3 = arith.constant 0.000000e+00 : f32
    %11 = vector.broadcast %cst_3 : f32 to vector<4x16xf32>
    %12 = arith.select %9, %10, %11 : vector<4x16xi1>, vector<4x16xf32>
    %c0_4 = arith.constant 0 : index
    %c0_5 = arith.constant 0 : index
    %13 = vector.load %arg5[%c0_4, %c0_5] : memref<4x1xf32, #tpu.memory_space<vmem>>, vector<4x1xf32>
    %c1 = arith.constant 1 : index
    %c0_6 = arith.constant 0 : index
    %c0_7 = arith.constant 0 : index
    %14 = vector.load %arg4[%c1, %c0_6, %c0_7] : memref<3x4x4xf32, #tpu.memory_space<vmem>>, vector<1x4x4xf32>
    %15 = vector.shape_cast %14 : vector<1x4x4xf32> to vector<4x4xf32>
    %cst_8 = arith.constant dense<0.000000e+00> : vector<4x16xf32>
    %16 = tpu.matmul %15, %1, %cst_8 {dimension_numbers = #tpu.dot_dimension_numbers<[1], [0], [0], [1], [0, 0, 1, 1], [], []>} : vector<4x4xf32>, vector<4x16xf32>, vector<4x16xf32> -> vector<4x16xf32>
    %17 = vector.broadcast %13 : vector<4x1xf32> to vector<4x16xf32>
    %18 = arith.addf %16, %17 : vector<4x16xf32>
    %c0_9 = arith.constant 0 : index
    %c0_10 = arith.constant 0 : index
    %c0_11 = arith.constant 0 : index
    %19 = vector.load %arg4[%c0_9, %c0_10, %c0_11] : memref<3x4x4xf32, #tpu.memory_space<vmem>>, vector<1x4x4xf32>
    %20 = vector.shape_cast %19 : vector<1x4x4xf32> to vector<4x4xf32>
    %cst_12 = arith.constant dense<0.000000e+00> : vector<4x16xf32>
    %21 = tpu.matmul %20, %7, %cst_12 {dimension_numbers = #tpu.dot_dimension_numbers<[1], [0], [0], [1], [0, 0, 1, 1], [], []>} : vector<4x4xf32>, vector<4x16xf32>, vector<4x16xf32> -> vector<4x16xf32>
    %22 = arith.addf %18, %21 : vector<4x16xf32>
    %c2 = arith.constant 2 : index
    %c0_13 = arith.constant 0 : index
    %c0_14 = arith.constant 0 : index
    %23 = vector.load %arg4[%c2, %c0_13, %c0_14] : memref<3x4x4xf32, #tpu.memory_space<vmem>>, vector<1x4x4xf32>
    %24 = vector.shape_cast %23 : vector<1x4x4xf32> to vector<4x4xf32>
    %cst_15 = arith.constant dense<0.000000e+00> : vector<4x16xf32>
    %25 = tpu.matmul %24, %12, %cst_15 {dimension_numbers = #tpu.dot_dimension_numbers<[1], [0], [0], [1], [0, 0, 1, 1], [], []>} : vector<4x4xf32>, vector<4x16xf32>, vector<4x16xf32> -> vector<4x16xf32>
    %26 = arith.addf %22, %25 : vector<4x16xf32>
    %cst_16 = arith.constant dense<0.000000e+00> : vector<4xf32>
    %27 = vector.multi_reduction <add>, %26, %cst_16 [1] : vector<4x16xf32> to vector<4xf32>
    %28 = vector.shape_cast %27 : vector<4xf32> to vector<4x1xf32>
    %cst_17 = arith.constant 6.250000e-02 : f32
    %29 = vector.broadcast %cst_17 : f32 to vector<4x1xf32>
    %30 = arith.mulf %28, %29 : vector<4x1xf32>
    %31 = arith.mulf %26, %26 : vector<4x16xf32>
    %cst_18 = arith.constant dense<0.000000e+00> : vector<4xf32>
    %32 = vector.multi_reduction <add>, %31, %cst_18 [1] : vector<4x16xf32> to vector<4xf32>
    %33 = vector.shape_cast %32 : vector<4xf32> to vector<4x1xf32>
    %cst_19 = arith.constant 6.250000e-02 : f32
    %34 = vector.broadcast %cst_19 : f32 to vector<4x1xf32>
    %35 = arith.mulf %33, %34 : vector<4x1xf32>
    %36 = arith.mulf %30, %30 : vector<4x1xf32>
    %37 = arith.subf %35, %36 : vector<4x1xf32>
    %cst_20 = arith.constant 0.000000e+00 : f32
    %38 = vector.broadcast %cst_20 : f32 to vector<4x1xf32>
    %39 = arith.maximumf %37, %38 : vector<4x1xf32>
    %40 = vector.broadcast %30 : vector<4x1xf32> to vector<4x16xf32>
    %41 = arith.subf %26, %40 : vector<4x16xf32>
    %cst_21 = arith.constant 9.99999974E-6 : f32
    %42 = vector.broadcast %cst_21 : f32 to vector<4x1xf32>
    %43 = arith.addf %39, %42 : vector<4x1xf32>
    %44 = math.rsqrt %43 : vector<4x1xf32>
    %45 = vector.broadcast %44 : vector<4x1xf32> to vector<4x16xf32>
    %46 = arith.mulf %41, %45 : vector<4x16xf32>
    %c0_22 = arith.constant 0 : index
    %c0_23 = arith.constant 0 : index
    %c0_24 = arith.constant 0 : index
    %47 = vector.load %arg3[%c0_22, %c0_23, %c0_24] : memref<1x4x16xf32, #tpu.memory_space<vmem>>, vector<1x4x16xf32>
    %48 = vector.shape_cast %47 : vector<1x4x16xf32> to vector<4x16xf32>
    %49 = arith.addf %46, %48 : vector<4x16xf32>
    %cst_25 = arith.constant 0.000000e+00 : f32
    %50 = vector.broadcast %cst_25 : f32 to vector<4x16xf32>
    %51 = arith.maximumf %49, %50 : vector<4x16xf32>
    %52 = vector.shape_cast %51 : vector<4x16xf32> to vector<1x4x16xf32>
    %c0_26 = arith.constant 0 : index
    %c0_27 = arith.constant 0 : index
    %c0_28 = arith.constant 0 : index
    %53 = vector.load %arg6[%c0_26, %c0_27, %c0_28] : memref<1x4x16xf32, #tpu.memory_space<vmem>>, vector<1x4x16xf32>
    tpu.vector_store %arg6[%c0_26, %c0_27, %c0_28], %52 {strides = array<i32>} : memref<1x4x16xf32, #tpu.memory_space<vmem>>, vector<1x4x16xf32>,
    return
  }
  func.func @transform_0(%arg0: i32, %arg1: i32) -> (i32, i32, i32) {
    %c0_i32 = arith.constant 0 : i32
    %c0_i32_0 = arith.constant 0 : i32
    %c0_i32_1 = arith.constant 0 : i32
    return %arg0, %c0_i32, %c0_i32_0 : i32, i32, i32
  }
  func.func @transform_1(%arg0: i32, %arg1: i32) -> (i32, i32, i32) {
    %c0_i32 = arith.constant 0 : i32
    %c0_i32_0 = arith.constant 0 : i32
    return %arg0, %arg1, %c0_i32 : i32, i32, i32
  }
  func.func @transform_2(%arg0: i32, %arg1: i32) -> (i32, i32, i32) {
    %c0_i32 = arith.constant 0 : i32
    %c0_i32_0 = arith.constant 0 : i32
    %c0_i32_1 = arith.constant 0 : i32
    return %c0_i32, %arg1, %c0_i32_0 : i32, i32, i32
  }
  func.func @transform_3(%arg0: i32, %arg1: i32) -> (i32, i32) {
    %c0_i32 = arith.constant 0 : i32
    %c0_i32_0 = arith.constant 0 : i32
    return %arg1, %c0_i32 : i32, i32
  }
  func.func @transform_4(%arg0: i32, %arg1: i32) -> (i32, i32, i32) {
    %c0_i32 = arith.constant 0 : i32
    %c0_i32_0 = arith.constant 0 : i32
    return %arg0, %arg1, %c0_i32 : i32, i32, i32
  }
}

</mosaic_0001>

<llo_original>
// kernel: tpu_custom_call.1
$region0: #{tpu_custom_call.1}
  #allocation0 [shape = 'u32[]', space=smem, size = 0x4, offset = 0x4, fixed_abs, tag = 'smem constant byte address 0x4 - core index']
  #allocation1 [shape = 'u32[144,128]{1,0:T(1,128)}', space=vmem, size = 0x12000, scoped, tag = 'internal scratch']
  %s0 = inlined_call_operand.hbm [shape: f32[2,4,16], index: 0, kind: input, shape index: {}]
  %s1 = inlined_call_operand.hbm [shape: f32[2,4,16], index: 1, kind: input, shape index: {}]
  %s2 = inlined_call_operand.vmem [shape: f32[3,4,4], index: 2, kind: input, shape index: {}]
  %s3 = inlined_call_operand.vmem [shape: f32[4,1], index: 3, kind: input, shape index: {}]
  %s4 = inlined_call_operand.hbm [shape: f32[2,4,16], index: 4, kind: output, shape index: {}]
  %s5 = sld [smem:[#allocation0]]
  $region57: #{tpu_custom_call.1} parent=0
    _
  %s7 = ssub.s32 1, %s5
  %s8 = scalar_select 0, %s7, %s5
  $region1: #{tpu_custom_call.1} parent=0
    #allocation2 [shape = 'u8[4096]{0}', space=vmem, size = 0x1000, scoped, tag = 'input window, operand 0']
    #allocation3 [shape = 's32[2]{0}', space=sflag, size = 0x8, scoped, tag = 'scoped memory for tpu_custom_call.1']
    #allocation4 [shape = 's32[2]{0}', space=sflag, size = 0x8, scoped, tag = 'scoped memory for tpu_custom_call.1']
    #allocation5 [shape = 'u8[4096]{0}', space=vmem, size = 0x1000, scoped, tag = 'input window, operand 1']
    #allocation6 [shape = 's32[2]{0}', space=sflag, size = 0x8, scoped, tag = 'scoped memory for tpu_custom_call.1']
    #allocation7 [shape = 'u8[4096]{0}', space=vmem, size = 0x1000, scoped, tag = 'output window, operand 0']
    %9 = vsyncpa [#allocation3], 0
    %s10 = scalar_lea.sflag [#allocation3], 1
    %11 = vsyncpa %s10, 0
    %12 = vsyncpa [#allocation6], 0
    %s13 = scalar_lea.sflag [#allocation6], 1
    %14 = vsyncpa %s13, 0
    %15 = vsyncpa [#allocation4], 0
    %s16 = scalar_lea.sflag [#allocation4], 1
    %17 = vsyncpa %s16, 0
    loop: start=0, step=1, limit=4
    $region2: #{tpu_custom_call.1} parent=1 // loop_pre_header
      _
    $region3: #{tpu_custom_call.1} parent=1 // loop_header
      %s19 = sphi 0, %s23
      %p20 = scmp.ge.s32.totalorder %s19, 4
      %s26 = sphi 0, %s38
      %s27 = sphi 0, %s34
      %s28 = sphi 0, %s26
      %s29 = sphi 0, %s27
      %s30 = sphi 0, %s28
      %s31 = sphi 0, %s29
      %s41 = sphi 0, %s43
      %s44 = sphi 0, %s41
      %s45 = sphi 0, %s44
      %s61 = sphi 0, %s45
      %s69 = sphi 0, %s71
      %s72 = sphi 0, %s69
      %s73 = sphi 0, %s72
      %s89 = sphi 0, %s73
      %s95 = sphi 0, %s97
      %s98 = sphi 0, %s95
      %s99 = sphi 0, %s98
      %s115 = sphi 0, %s99
      %s121 = sphi 0, %s123
      %s124 = sphi 0, %s121
      %s125 = sphi 0, %s124
      %s141 = sphi 0, %s125
      %s149 = sphi 0, %s151
      %s152 = sphi 0, %s149
      %s153 = sphi 0, %s152
      %s169 = sphi 0, %s153
    $region4: #{tpu_custom_call.1} parent=1 // loop_header_branch
      %22 = sbr.rel (%p20) target = $region8
    $region5: #{tpu_custom_call.1} parent=1 // loop_body
      %s24 = ssub.s32 %s19, 1
      %s25 = ssub.s32 %s19, 2
      %s32 = sadd.s32 1, %s27
      %p33 = scmp.ge.s32.totalorder %s32, 1
      %s34 = scalar_select %p33, 0, %s32
      %s35 = sadd.s32 1, %s26
      %s36 = scalar_select %p33, %s35, %s26
      %p37 = scmp.ge.s32.totalorder %s36, 2
      %s38 = scalar_select %p37, 0, %s36
      %s39 = ssub.s32 %s26, %s38
      %p40 = scmp.eq.s32.totalorder %s39, 0
      %s42 = sadd.s32 %s41, 1
      %s43 = scalar_select %p40, %s41, %s42
      %p46 = pneg %p40
      %p47 = scmp.eq.s32.totalorder %s19, 1
      %p48 = por %p46, %p47
      %p49 = scmp.ne.s32.totalorder %s41, %s44
      %p50 = scmp.eq.s32.totalorder %s19, 0
      %p51 = por %p49, %p50
      %p52 = scmp.ne.s32.totalorder %s41, %s44
      %p53 = scmp.eq.s32.totalorder %s24, 1
      %p54 = por %p52, %p53
      %p55 = scmp.ne.s32.totalorder %s44, %s45
      %p56 = scmp.eq.s32.totalorder %s24, 0
      %p57 = por %p55, %p56
      %p58 = scmp.ne.s32.totalorder %s44, %s45
      %p59 = scmp.eq.s32.totalorder %s25, 1
      %p60 = por %p58, %p59
      %p62 = scmp.ne.s32.totalorder %s45, %s61
      %p63 = scmp.eq.s32.totalorder %s25, 0
      %p64 = por %p62, %p63
      %s65 = ssub.s32 %s26, %s38
      %s66 = ssub.s32 %s27, %s34
      %s67 = sor.u32 %s65, %s66
      %p68 = scmp.eq.s32.totalorder %s67, 0
      %s70 = sadd.s32 %s69, 1
      %s71 = scalar_select %p68, %s69, %s70
      %p74 = pneg %p68
      %p75 = scmp.eq.s32.totalorder %s19, 1
      %p76 = por %p74, %p75
      %p77 = scmp.ne.s32.totalorder %s69, %s72
      %p78 = scmp.eq.s32.totalorder %s19, 0
      %p79 = por %p77, %p78
      %p80 = scmp.ne.s32.totalorder %s69, %s72
      %p81 = scmp.eq.s32.totalorder %s24, 1
      %p82 = por %p80, %p81
      %p83 = scmp.ne.s32.totalorder %s72, %s73
      %p84 = scmp.eq.s32.totalorder %s24, 0
      %p85 = por %p83, %p84
      %p86 = scmp.ne.s32.totalorder %s72, %s73
      %p87 = scmp.eq.s32.totalorder %s25, 1
      %p88 = por %p86, %p87
      %p90 = scmp.ne.s32.totalorder %s73, %s89
      %p91 = scmp.eq.s32.totalorder %s25, 0
      %p92 = por %p90, %p91
      %s93 = ssub.s32 %s27, %s34
      %p94 = scmp.eq.s32.totalorder %s93, 0
      %s96 = sadd.s32 %s95, 1
      %s97 = scalar_select %p94, %s95, %s96
      %p100 = pneg %p94
      %p101 = scmp.eq.s32.totalorder %s19, 1
      %p102 = por %p100, %p101
      %p103 = scmp.ne.s32.totalorder %s95, %s98
      %p104 = scmp.eq.s32.totalorder %s19, 0
      %p105 = por %p103, %p104
      %p106 = scmp.ne.s32.totalorder %s95, %s98
      %p107 = scmp.eq.s32.totalorder %s24, 1
      %p108 = por %p106, %p107
      %p109 = scmp.ne.s32.totalorder %s98, %s99
      %p110 = scmp.eq.s32.totalorder %s24, 0
      %p111 = por %p109, %p110
      %p112 = scmp.ne.s32.totalorder %s98, %s99
      %p113 = scmp.eq.s32.totalorder %s25, 1
      %p114 = por %p112, %p113
      %p116 = scmp.ne.s32.totalorder %s99, %s115
      %p117 = scmp.eq.s32.totalorder %s25, 0
      %p118 = por %p116, %p117
      %s119 = ssub.s32 %s27, %s34
      %p120 = scmp.eq.s32.totalorder %s119, 0
      %s122 = sadd.s32 %s121, 1
      %s123 = scalar_select %p120, %s121, %s122
      %p126 = pneg %p120
      %p127 = scmp.eq.s32.totalorder %s19, 1
      %p128 = por %p126, %p127
      %p129 = scmp.ne.s32.totalorder %s121, %s124
      %p130 = scmp.eq.s32.totalorder %s19, 0
      %p131 = por %p129, %p130
      %p132 = scmp.ne.s32.totalorder %s121, %s124
      %p133 = scmp.eq.s32.totalorder %s24, 1
      %p134 = por %p132, %p133
      %p135 = scmp.ne.s32.totalorder %s124, %s125
      %p136 = scmp.eq.s32.totalorder %s24, 0
      %p137 = por %p135, %p136
      %p138 = scmp.ne.s32.totalorder %s124, %s125
      %p139 = scmp.eq.s32.totalorder %s25, 1
      %p140 = por %p138, %p139
      %p142 = scmp.ne.s32.totalorder %s125, %s141
      %p143 = scmp.eq.s32.totalorder %s25, 0
      %p144 = por %p142, %p143
      %s145 = ssub.s32 %s26, %s38
      %s146 = ssub.s32 %s27, %s34
      %s147 = sor.u32 %s145, %s146
      %p148 = scmp.eq.s32.totalorder %s147, 0
      %s150 = sadd.s32 %s149, 1
      %s151 = scalar_select %p148, %s149, %s150
      %p154 = pneg %p148
      %p155 = scmp.eq.s32.totalorder %s19, 1
      %p156 = por %p154, %p155
      %p157 = scmp.ne.s32.totalorder %s149, %s152
      %p158 = scmp.eq.s32.totalorder %s19, 0
      %p159 = por %p157, %p158
      %p160 = scmp.ne.s32.totalorder %s149, %s152
      %p161 = scmp.eq.s32.totalorder %s24, 1
      %p162 = por %p160, %p161
      %p163 = scmp.ne.s32.totalorder %s152, %s153
      %p164 = scmp.eq.s32.totalorder %s24, 0
      %p165 = por %p163, %p164
      %p166 = scmp.ne.s32.totalorder %s152, %s153
      %p167 = scmp.eq.s32.totalorder %s25, 1
      %p168 = por %p166, %p167
      %p170 = scmp.ne.s32.totalorder %s153, %s169
      %p171 = scmp.eq.s32.totalorder %s25, 0
      %p172 = por %p170, %p171
      %p173 = scmp.le.s32.totalorder 1, %s19
      %p174 = scmp.lt.s32.totalorder %s19, 3
      %p175 = pnand %p173, %p174
      %p176 = pneg %p175
      // Predicated region
      $region9: #{tpu_custom_call.1} parent=5 // pred_check
        _
      $region10: #{tpu_custom_call.1} parent=5 // pred_check_branch
        %178 = sbr.rel (%p175) target = $region12
      $region11: #{tpu_custom_call.1} parent=5 // pred_region
        %s179 = ssub.s32 %s19, 1
        // Predicated region
        $region13: #{tpu_custom_call.1} parent=11 // pred_check
          %p180 = pneg %p111
        $region14: #{tpu_custom_call.1} parent=11 // pred_check_branch
          %182 = sbr.rel (%p180) target = $region16
        $region15: #{tpu_custom_call.1} parent=11 // pred_region
          %p183 = scmp.lt.s32.totalorder %s29, 0
          %s184 = scalar_select %p183, %s29, 0
          %s185 = smul.addr %s184, 4
          %s186 = scalar_lea.vmem %s2, %s185
        $region16: #{tpu_custom_call.1} parent=11 // pred_fallthru
          _
        // Predicated region
        $region17: #{tpu_custom_call.1} parent=11 // pred_check
          %p187 = pneg %p137
        $region18: #{tpu_custom_call.1} parent=11 // pred_check_branch
          %189 = sbr.rel (%p187) target = $region20
        $region19: #{tpu_custom_call.1} parent=11 // pred_region
          %p190 = scmp.lt.s32.totalorder %s29, 0
          %s191 = scalar_select %p190, %s29, 0
          %s192 = smul.addr %s191, 4
          %s193 = scalar_lea.vmem %s3, %s192
        $region20: #{tpu_custom_call.1} parent=11 // pred_fallthru
          _
      $region12: #{tpu_custom_call.1} parent=5 // pred_fallthru
        _
      %p194 = scmp.lt.s32.totalorder %s19, 2
      // Predicated region
      $region21: #{tpu_custom_call.1} parent=5 // pred_check
        %p195 = pneg %p194
      $region22: #{tpu_custom_call.1} parent=5 // pred_check_branch
        %197 = sbr.rel (%p195) target = $region24
      $region23: #{tpu_custom_call.1} parent=5 // pred_region
        // Predicated region
        $region25: #{tpu_custom_call.1} parent=23 // pred_check
          %p198 = pneg %p51
        $region26: #{tpu_custom_call.1} parent=23 // pred_check_branch
          %200 = sbr.rel (%p198) target = $region28
        $region27: #{tpu_custom_call.1} parent=23 // pred_region
          %s201 = sand.u32 %s41, 1
          %s202 = scalar_lea.sflag [#allocation3], %s201
          %s203 = sand.u32 %s41, 1
          %s204 = smul.addr %s203, 4
          %s205 = scalar_lea.vmem [#allocation2], %s204
          %s207 = ssub.s32 64, 64
          %208 = vsyncadd %s202, %s207
          %s209 = smul.addr %s26, 64
          %s210 = scalar_lea.hbm %s0, %s209
          %s212 = sshll.u32 %s205, 4
          %s213 = int_to_ptr.vmem [resolvable:$true] %s212
          %215 = dma.hbm_to_vmem [thread:$0]  %s210, 64, %s213, %s202
        $region28: #{tpu_custom_call.1} parent=23 // pred_fallthru
          _
        // Predicated region
        $region29: #{tpu_custom_call.1} parent=23 // pred_check
          %p216 = pneg %p79
        $region30: #{tpu_custom_call.1} parent=23 // pred_check_branch
          %218 = sbr.rel (%p216) target = $region32
        $region31: #{tpu_custom_call.1} parent=23 // pred_region
          %s219 = sand.u32 %s69, 1
          %s220 = scalar_lea.sflag [#allocation6], %s219
          %s221 = sand.u32 %s69, 1
          %s222 = smul.addr %s221, 4
          %s223 = scalar_lea.vmem [#allocation5], %s222
          %s225 = ssub.s32 64, 64
          %226 = vsyncadd %s220, %s225
          %s227 = sadd.s32 %s27, %s26
          %s228 = smul.addr %s227, 64
          %s229 = scalar_lea.hbm %s1, %s228
          %s231 = sshll.u32 %s223, 4
          %s232 = int_to_ptr.vmem [resolvable:$true] %s231
          %234 = dma.hbm_to_vmem [thread:$0]  %s229, 64, %s232, %s220
        $region32: #{tpu_custom_call.1} parent=23 // pred_fallthru
          _
      $region24: #{tpu_custom_call.1} parent=5 // pred_fallthru
        _
      %p235 = scmp.le.s32.totalorder 1, %s19
      %p236 = scmp.lt.s32.totalorder %s19, 3
      %p237 = pnand %p235, %p236
      %p238 = pneg %p237
      // Predicated region
      $region33: #{tpu_custom_call.1} parent=5 // pred_check
        _
      $region34: #{tpu_custom_call.1} parent=5 // pred_check_branch
        %240 = sbr.rel (%p237) target = $region36
      $region35: #{tpu_custom_call.1} parent=5 // pred_region
        %s241 = ssub.s32 %s19, 1
        %s242 = sand.u32 %s44, 1
        %s243 = scalar_lea.sflag [#allocation3], %s242
        %s244 = sand.u32 %s44, 1
        %s245 = smul.addr %s244, 4
        %s246 = scalar_lea.vmem [#allocation2], %s245
        // Predicated region
        $region37: #{tpu_custom_call.1} parent=35 // pred_check
          %p247 = pneg %p57
        $region38: #{tpu_custom_call.1} parent=35 // pred_check_branch
          %249 = sbr.rel (%p247) target = $region40
        $region39: #{tpu_custom_call.1} parent=35 // pred_region
          %250 = dma.done %s243, 64
        $region40: #{tpu_custom_call.1} parent=35 // pred_fallthru
          _
        %s251 = sand.u32 %s72, 1
        %s252 = scalar_lea.sflag [#allocation6], %s251
        %s253 = sand.u32 %s72, 1
        %s254 = smul.addr %s253, 4
        %s255 = scalar_lea.vmem [#allocation5], %s254
        // Predicated region
        $region41: #{tpu_custom_call.1} parent=35 // pred_check
          %p256 = pneg %p85
        $region42: #{tpu_custom_call.1} parent=35 // pred_check_branch
          %258 = sbr.rel (%p256) target = $region44
        $region43: #{tpu_custom_call.1} parent=35 // pred_region
          %259 = dma.done %s252, 64
        $region44: #{tpu_custom_call.1} parent=35 // pred_fallthru
          _
        %s260 = sand.u32 %s44, 1
        %s261 = scalar_lea.sflag [#allocation3], %s260
        %s262 = sand.u32 %s44, 1
        %s263 = smul.addr %s262, 4
        %s264 = scalar_lea.vmem [#allocation2], %s263
        %p265 = pneg %p57
        %p266 = pneg %p54
        %s267 = sand.u32 %s72, 1
        %s268 = scalar_lea.sflag [#allocation6], %s267
        %s269 = sand.u32 %s72, 1
        %s270 = smul.addr %s269, 4
        %s271 = scalar_lea.vmem [#allocation5], %s270
        %p272 = pneg %p85
        %p273 = pneg %p82
        %p274 = scmp.lt.s32.totalorder %s29, 0
        %s275 = scalar_select %p274, %s29, 0
        %s276 = smul.addr %s275, 4
        %s277 = scalar_lea.vmem %s2, %s276
        %p278 = pneg %p111
        %p279 = pneg %p108
        %p280 = scmp.lt.s32.totalorder %s29, 0
        %s281 = scalar_select %p280, %s29, 0
        %s282 = smul.addr %s281, 4
        %s283 = scalar_lea.vmem %s3, %s282
        %p284 = pneg %p137
        %p285 = pneg %p134
        %p286 = pneg %p165
        %p287 = pneg %p162
        %s288 = sand.u32 %s152, 1
        %s289 = scalar_lea.sflag [#allocation4], %s288
        %s290 = sand.u32 %s152, 1
        %s291 = smul.addr %s290, 4
        %s292 = scalar_lea.vmem [#allocation7], %s291
        %p293 = scmp.lt.s32.totalorder %s29, 0
        %s294 = scalar_select %p293, %s29, 0
        %s295 = smul.addr %s294, 4
        %s296 = scalar_lea.vmem %s2, %s295
        %p297 = scmp.lt.s32.totalorder %s29, 0
        %s298 = scalar_select %p297, %s29, 0
        %s299 = smul.addr %s298, 4
        %s300 = scalar_lea.vmem %s3, %s299
        %v301 = vld [vmem:[%s246] sm:$0xf]
        %v302 = vlaneseq
        %v303 = vand.u32 %v302, 127
        %vm304 = vcmp.gt.s32.totalorder %v303, 0
        %vm305 = vcmask 1047680
        %306 = vrot.lane.b32.xlu0 %v301, 16
        %v307 = vpop.permute.xlu0 %306
        %v308 = vsel %vm305, %v307, %v301
        %309 = vrot.lane.b32.xlu0 %v308, 16
        %v310 = vpop.permute.xlu0 %309
        %v311 = vsel %vm305, %v310, %v301
        %313 = vrot.lane.b32.xlu0 %v311, 113
        %v314 = vpop.permute.xlu0 %313
        %v316 = vsel %vm304, %v314, 0.0
        %vm317 = vcmp.lt.s32.totalorder %v303, 15
        %318 = vrot.lane.b32.xlu0 %v311, 127
        %v319 = vpop.permute.xlu0 %318
        %v321 = vsel %vm317, %v319, 0.0
        %v322 = vld [vmem:[%s300] sm:$0xf]
        %s323 = scalar_lea.vmem %s296, 4
        %v324 = vld [vmem:[%s323] sm:$0xf]
        %326 = vset.pattern.permute.xlu0 0
        %327 = vperm.xlu0 %326, %v322
        %v328 = vpop.permute.xlu0 %327
        %vm330 = vcmask 31744
        %v332 = vsel %vm330, %v324, 0
        %vm334 = vcmask 1043456
        %v336 = vsel %vm334, %v301, 0
        %338 = vmatprep.subr.mxu0 0.0
        %339 = vmatpush1.msra.mxu0 %v336
        %340 = vmatprep.subr.mxu0 0.0
        %341 = vmatpush1.msra.mxu0 0.0
        %342 = vmatprep.subr.mxu0 0.0
        %343 = vmatpush1.msra.mxu0 0.0
        %344 = vmatprep.subr.mxu0 0.0
        %345 = vmatpush1.msra.mxu0 0.0
        %346 = vmatprep.subr.mxu0 0.0
        %347 = vmatpush1.msra.mxu0 0.0
        %348 = vmatprep.subr.mxu0 0.0
        %349 = vmatpush1.msra.mxu0 0.0
        %350 = vmatprep.subr.mxu0 0.0
        %351 = vmatpush1.msra.mxu0 0.0
        %352 = vmatprep.subr.mxu0 0.0
        %353 = vmatpush1.msra.mxu0 0.0
        %354 = vmatprep.subr.mxu0 0.0
        %355 = vmatpush1.msra.mxu0 0.0
        %356 = vmatprep.subr.mxu0 0.0
        %357 = vmatpush1.msra.mxu0 0.0
        %358 = vmatprep.subr.mxu0 0.0
        %359 = vmatpush1.msra.mxu0 0.0
        %360 = vmatprep.subr.mxu0 0.0
        %361 = vmatpush1.msra.mxu0 0.0
        %362 = vmatprep.subr.mxu0 0.0
        %363 = vmatpush1.msra.mxu0 0.0
        %364 = vmatprep.subr.mxu0 0.0
        %365 = vmatpush1.msra.mxu0 0.0
        %366 = vmatprep.subr.mxu0 0.0
        %367 = vmatpush1.msra.mxu0 0.0
        %368 = vmatprep.subr.mxu0 0.0
        %369 = vmatpush1.msra.mxu0 0.0
        %370 = vmatprep.subr.mxu0 0.0
        %371 = vmatpush1.msra.mxu0 0.0
        %372 = vmatprep.subr.mxu0 0.0
        %373 = vmatpush1.msra.mxu0 0.0
        %374 = vmatprep.subr.mxu0 0.0
        %375 = vmatpush1.msra.mxu0 0.0
        %376 = vmatprep.subr.mxu0 0.0
        %377 = vmatpush1.msra.mxu0 0.0
        %378 = vmatprep.subr.mxu0 0.0
        %379 = vmatpush1.msra.mxu0 0.0
        %380 = vmatprep.subr.mxu0 0.0
        %381 = vmatpush1.msra.mxu0 0.0
        %382 = vmatprep.subr.mxu0 0.0
        %383 = vmatpush1.msra.mxu0 0.0
        %384 = vmatprep.subr.mxu0 0.0
        %385 = vmatpush1.msra.mxu0 0.0
        %386 = vmatprep.subr.mxu0 0.0
        %387 = vmatpush1.msra.mxu0 0.0
        %388 = vmatprep.subr.mxu0 0.0
        %389 = vmatpush1.msra.mxu0 0.0
        %390 = vmatprep.subr.mxu0 0.0
        %391 = vmatpush1.msra.mxu0 0.0
        %392 = vmatprep.subr.mxu0 0.0
        %393 = vmatpush1.msra.mxu0 0.0
        %394 = vmatprep.subr.mxu0 0.0
        %395 = vmatpush1.msra.mxu0 0.0
        %396 = vmatprep.subr.mxu0 0.0
        %397 = vmatpush1.msra.mxu0 0.0
        %398 = vmatprep.subr.mxu0 0.0
        %399 = vmatpush1.msra.mxu0 0.0
        %400 = vmatprep.subr.mxu0 0.0
        %401 = vmatpush1.msra.mxu0 0.0
        %402 = vmatprep.mubr.f32.mxu0 0.0
        %403 = vmatmul.mubr.f32.gmra.mrb[0].mxu0 %v332
        %v404 = vpop.f32.mrb[0].mxu0
        %v405 = vadd.f32 %v328, %v404
        %v406 = vpop.f32.mrb[0].mxu0
        %407 = vdwg.mxu0
        %v408 = vld [vmem:[%s296] sm:$0xf]
        %v410 = vsel %vm330, %v408, 0
        %v413 = vsel %vm334, %v316, 0
        %415 = vmatprep.subr.mxu0 0.0
        %416 = vmatpush1.msra.mxu0 %v413
        %417 = vmatprep.subr.mxu0 0.0
        %418 = vmatpush1.msra.mxu0 0.0
        %419 = vmatprep.subr.mxu0 0.0
        %420 = vmatpush1.msra.mxu0 0.0
        %421 = vmatprep.subr.mxu0 0.0
        %422 = vmatpush1.msra.mxu0 0.0
        %423 = vmatprep.subr.mxu0 0.0
        %424 = vmatpush1.msra.mxu0 0.0
        %425 = vmatprep.subr.mxu0 0.0
        %426 = vmatpush1.msra.mxu0 0.0
        %427 = vmatprep.subr.mxu0 0.0
        %428 = vmatpush1.msra.mxu0 0.0
        %429 = vmatprep.subr.mxu0 0.0
        %430 = vmatpush1.msra.mxu0 0.0
        %431 = vmatprep.subr.mxu0 0.0
        %432 = vmatpush1.msra.mxu0 0.0
        %433 = vmatprep.subr.mxu0 0.0
        %434 = vmatpush1.msra.mxu0 0.0
        %435 = vmatprep.subr.mxu0 0.0
        %436 = vmatpush1.msra.mxu0 0.0
        %437 = vmatprep.subr.mxu0 0.0
        %438 = vmatpush1.msra.mxu0 0.0
        %439 = vmatprep.subr.mxu0 0.0
        %440 = vmatpush1.msra.mxu0 0.0
        %441 = vmatprep.subr.mxu0 0.0
        %442 = vmatpush1.msra.mxu0 0.0
        %443 = vmatprep.subr.mxu0 0.0
        %444 = vmatpush1.msra.mxu0 0.0
        %445 = vmatprep.subr.mxu0 0.0
        %446 = vmatpush1.msra.mxu0 0.0
        %447 = vmatprep.subr.mxu0 0.0
        %448 = vmatpush1.msra.mxu0 0.0
        %449 = vmatprep.subr.mxu0 0.0
        %450 = vmatpush1.msra.mxu0 0.0
        %451 = vmatprep.subr.mxu0 0.0
        %452 = vmatpush1.msra.mxu0 0.0
        %453 = vmatprep.subr.mxu0 0.0
        %454 = vmatpush1.msra.mxu0 0.0
        %455 = vmatprep.subr.mxu0 0.0
        %456 = vmatpush1.msra.mxu0 0.0
        %457 = vmatprep.subr.mxu0 0.0
        %458 = vmatpush1.msra.mxu0 0.0
        %459 = vmatprep.subr.mxu0 0.0
        %460 = vmatpush1.msra.mxu0 0.0
        %461 = vmatprep.subr.mxu0 0.0
        %462 = vmatpush1.msra.mxu0 0.0
        %463 = vmatprep.subr.mxu0 0.0
        %464 = vmatpush1.msra.mxu0 0.0
        %465 = vmatprep.subr.mxu0 0.0
        %466 = vmatpush1.msra.mxu0 0.0
        %467 = vmatprep.subr.mxu0 0.0
        %468 = vmatpush1.msra.mxu0 0.0
        %469 = vmatprep.subr.mxu0 0.0
        %470 = vmatpush1.msra.mxu0 0.0
        %471 = vmatprep.subr.mxu0 0.0
        %472 = vmatpush1.msra.mxu0 0.0
        %473 = vmatprep.subr.mxu0 0.0
        %474 = vmatpush1.msra.mxu0 0.0
        %475 = vmatprep.subr.mxu0 0.0
        %476 = vmatpush1.msra.mxu0 0.0
        %477 = vmatprep.subr.mxu0 0.0
        %478 = vmatpush1.msra.mxu0 0.0
        %479 = vmatprep.mubr.f32.mxu0 0.0
        %480 = vmatmul.mubr.f32.gmra.mrb[0].mxu0 %v410
        %v481 = vpop.f32.mrb[0].mxu0
        %v482 = vadd.f32 0.0, %v481
        %v483 = vpop.f32.mrb[0].mxu0
        %484 = vdwg.mxu0
        %v485 = vadd.f32 %v405, %v482
        %s486 = scalar_lea.vmem %s296, 8
        %v487 = vld [vmem:[%s486] sm:$0xf]
        %v489 = vsel %vm330, %v487, 0
        %v492 = vsel %vm334, %v321, 0
        %494 = vmatprep.subr.mxu0 0.0
        %495 = vmatpush1.msra.mxu0 %v492
        %496 = vmatprep.subr.mxu0 0.0
        %497 = vmatpush1.msra.mxu0 0.0
        %498 = vmatprep.subr.mxu0 0.0
        %499 = vmatpush1.msra.mxu0 0.0
        %500 = vmatprep.subr.mxu0 0.0
        %501 = vmatpush1.msra.mxu0 0.0
        %502 = vmatprep.subr.mxu0 0.0
        %503 = vmatpush1.msra.mxu0 0.0
        %504 = vmatprep.subr.mxu0 0.0
        %505 = vmatpush1.msra.mxu0 0.0
        %506 = vmatprep.subr.mxu0 0.0
        %507 = vmatpush1.msra.mxu0 0.0
        %508 = vmatprep.subr.mxu0 0.0
        %509 = vmatpush1.msra.mxu0 0.0
        %510 = vmatprep.subr.mxu0 0.0
        %511 = vmatpush1.msra.mxu0 0.0
        %512 = vmatprep.subr.mxu0 0.0
        %513 = vmatpush1.msra.mxu0 0.0
        %514 = vmatprep.subr.mxu0 0.0
        %515 = vmatpush1.msra.mxu0 0.0
        %516 = vmatprep.subr.mxu0 0.0
        %517 = vmatpush1.msra.mxu0 0.0
        %518 = vmatprep.subr.mxu0 0.0
        %519 = vmatpush1.msra.mxu0 0.0
        %520 = vmatprep.subr.mxu0 0.0
        %521 = vmatpush1.msra.mxu0 0.0
        %522 = vmatprep.subr.mxu0 0.0
        %523 = vmatpush1.msra.mxu0 0.0
        %524 = vmatprep.subr.mxu0 0.0
        %525 = vmatpush1.msra.mxu0 0.0
        %526 = vmatprep.subr.mxu0 0.0
        %527 = vmatpush1.msra.mxu0 0.0
        %528 = vmatprep.subr.mxu0 0.0
        %529 = vmatpush1.msra.mxu0 0.0
        %530 = vmatprep.subr.mxu0 0.0
        %531 = vmatpush1.msra.mxu0 0.0
        %532 = vmatprep.subr.mxu0 0.0
        %533 = vmatpush1.msra.mxu0 0.0
        %534 = vmatprep.subr.mxu0 0.0
        %535 = vmatpush1.msra.mxu0 0.0
        %536 = vmatprep.subr.mxu0 0.0
        %537 = vmatpush1.msra.mxu0 0.0
        %538 = vmatprep.subr.mxu0 0.0
        %539 = vmatpush1.msra.mxu0 0.0
        %540 = vmatprep.subr.mxu0 0.0
        %541 = vmatpush1.msra.mxu0 0.0
        %542 = vmatprep.subr.mxu0 0.0
        %543 = vmatpush1.msra.mxu0 0.0
        %544 = vmatprep.subr.mxu0 0.0
        %545 = vmatpush1.msra.mxu0 0.0
        %546 = vmatprep.subr.mxu0 0.0
        %547 = vmatpush1.msra.mxu0 0.0
        %548 = vmatprep.subr.mxu0 0.0
        %549 = vmatpush1.msra.mxu0 0.0
        %550 = vmatprep.subr.mxu0 0.0
        %551 = vmatpush1.msra.mxu0 0.0
        %552 = vmatprep.subr.mxu0 0.0
        %553 = vmatpush1.msra.mxu0 0.0
        %554 = vmatprep.subr.mxu0 0.0
        %555 = vmatpush1.msra.mxu0 0.0
        %556 = vmatprep.subr.mxu0 0.0
        %557 = vmatpush1.msra.mxu0 0.0
        %558 = vmatprep.mubr.f32.mxu0 0.0
        %559 = vmatmul.mubr.f32.gmra.mrb[0].mxu0 %v489
        %v560 = vpop.f32.mrb[0].mxu0
        %v561 = vadd.f32 0.0, %v560
        %v562 = vpop.f32.mrb[0].mxu0
        %563 = vdwg.mxu0
        %v564 = vadd.f32 %v485, %v561
        %vm565 = vcmask 125952
        %v566 = vsel %vm565, %v564, 0.0
        %567 = vadd.xlane.f32.xlu0 %v566
        %v568 = vpop.xlane.xlu0 %567
        %v569 = vmul.f32 %v568, 0.0625
        %v570 = vmul.f32 %v564, %v564
        %v571 = vsel %vm565, %v570, 0.0
        %572 = vadd.xlane.f32.xlu0 %v571
        %v573 = vpop.xlane.xlu0 %572
        %v574 = vmul.f32 %v573, 0.0625
        %v575 = vmul.f32 %v569, %v569
        %v576 = vsub.f32 %v574, %v575
        %v577 = vmax.f32 %v576, 0.0
        %v578 = vsub.f32 %v564, %v569
        %v579 = vadd.f32 %v577, 1e-05
        %v580 = vrsqrt.pop %v579
        %v581 = vmul.f32 %v578, %v580
        %v582 = vld [vmem:[%s255] sm:$0xf]
        %v583 = vadd.f32 %v581, %v582
        %v584 = vmax.f32 %v583, 0.0
        %585 = vst.msk [vmem:[%s292] sm:$0xf] %vm565, %v584
        %s586 = sand.u32 %s152, 1
        %s587 = scalar_lea.sflag [#allocation4], %s586
        %s588 = sand.u32 %s152, 1
        %s589 = smul.addr %s588, 4
        %s590 = scalar_lea.vmem [#allocation7], %s589
        // Predicated region
        $region45: #{tpu_custom_call.1} parent=35 // pred_check
          %p591 = pneg %p162
        $region46: #{tpu_custom_call.1} parent=35 // pred_check_branch
          %593 = sbr.rel (%p591) target = $region48
        $region47: #{tpu_custom_call.1} parent=35 // pred_region
          %s595 = ssub.s32 64, 64
          %596 = vsyncadd %s587, %s595
          %s597 = sadd.s32 %s29, %s28
          %s598 = smul.addr %s597, 64
          %s599 = scalar_lea.hbm %s4, %s598
          %s601 = sshll.u32 %s590, 4
          %s602 = int_to_ptr.vmem [resolvable:$true] %s601
          %604 = dma.vmem_to_hbm [thread:$0]  %s602, 64, %s599, %s587
        $region48: #{tpu_custom_call.1} parent=35 // pred_fallthru
          _
      $region36: #{tpu_custom_call.1} parent=5 // pred_fallthru
        _
      %p605 = scmp.le.s32.totalorder 2, %s19
      // Predicated region
      $region49: #{tpu_custom_call.1} parent=5 // pred_check
        %p606 = pneg %p605
      $region50: #{tpu_custom_call.1} parent=5 // pred_check_branch
        %608 = sbr.rel (%p606) target = $region52
      $region51: #{tpu_custom_call.1} parent=5 // pred_region
        %s609 = ssub.s32 %s19, 2
        // Predicated region
        $region53: #{tpu_custom_call.1} parent=51 // pred_check
          %p610 = pneg %p168
        $region54: #{tpu_custom_call.1} parent=51 // pred_check_branch
          %612 = sbr.rel (%p610) target = $region56
        $region55: #{tpu_custom_call.1} parent=51 // pred_region
          %s613 = sand.u32 %s153, 1
          %s614 = scalar_lea.sflag [#allocation4], %s613
          %s615 = sand.u32 %s153, 1
          %s616 = smul.addr %s615, 4
          %s617 = scalar_lea.vmem [#allocation7], %s616
          %618 = dma.done %s614, 64
        $region56: #{tpu_custom_call.1} parent=51 // pred_fallthru
          _
      $region52: #{tpu_custom_call.1} parent=5 // pred_fallthru
        _
    $region6: #{tpu_custom_call.1} parent=1 // loop_footer
      %s23 = sadd.s32 1, %s19
    $region7: #{tpu_custom_call.1} parent=1 // loop_footer_branch
      %18 = sbr.rel target = $region3
    $region8: #{tpu_custom_call.1} parent=1 // loop_exit
      _
    %619 = vsyncpa [#allocation3], 1
    %s620 = scalar_lea.sflag [#allocation3], 1
    %621 = vsyncpa %s620, 1
    %622 = vsyncpa [#allocation6], 1
    %s623 = scalar_lea.sflag [#allocation6], 1
    %624 = vsyncpa %s623, 1
    %625 = vsyncpa [#allocation4], 1
    %s626 = scalar_lea.sflag [#allocation4], 1
    %627 = vsyncpa %s626, 1

</llo_original>
